<compile_context>
chip_gen: v5e
topology: v5e:2x2
jax: 0.10.0
libtpu: 0.0.40
codegen_flags: <defaults>
</compile_context>

<pallas_src>
import jax
import jax.numpy as jnp
from jax.experimental import pallas as pl
from jax.experimental.pallas import tpu as pltpu

LANE_TILE = 128  # lane-axis block (batch lives on lanes)

# Packed-parameter flat layout (row-major [out, in] per weight):
#   [0:4]   w2 (2x2)   [4:6]   b2 (2)
#   [6:12]  w3 (3x2)   [12:15] b3 (3)
#   [15:21] w4 (2x3)   [21:23] b4 (2)


def mlp_kernel(p_ref, x_ref, o_ref):
    # x_ref: [2, LANE_TILE] (features on sublanes, batch on lanes)
    x0 = x_ref[0:1, :]
    x1 = x_ref[1:2, :]

    def sig(h):
        # exp and reciprocal both run on the EUP slot.
        e = jnp.exp(-h)
        return pl.reciprocal(1.0 + e, approx=True)

    # layer2: 2 -> 2 (VPU scalar-broadcast FMAs, no MXU)
    h2_0 = sig(p_ref[0] * x0 + p_ref[1] * x1 + p_ref[4])
    h2_1 = sig(p_ref[2] * x0 + p_ref[3] * x1 + p_ref[5])

    # layer3: 2 -> 3
    h3_0 = sig(p_ref[6] * h2_0 + p_ref[7] * h2_1 + p_ref[12])
    h3_1 = sig(p_ref[8] * h2_0 + p_ref[9] * h2_1 + p_ref[13])
    h3_2 = sig(p_ref[10] * h2_0 + p_ref[11] * h2_1 + p_ref[14])

    # layer4: 3 -> 2
    h4_0 = sig(p_ref[15] * h3_0 + p_ref[16] * h3_1 + p_ref[17] * h3_2 + p_ref[21])
    h4_1 = sig(p_ref[18] * h3_0 + p_ref[19] * h3_1 + p_ref[20] * h3_2 + p_ref[22])

    # Lane-dense, unmasked stores (full 128-lane rows).
    o_ref[0:1, :] = h4_0
    o_ref[1:2, :] = h4_1


def mlp_forward(x, packed_params):
    """x: [N, 2] float32 -> [N, 2] float32 (same semantics as the PyTorch Model)."""
    n, f_in = x.shape
    assert f_in == 2
    n_pad = ((n + LANE_TILE - 1) // LANE_TILE) * LANE_TILE
    # Batch onto the lane axis: [2, N_pad]
    xt = jnp.zeros((2, n_pad), jnp.float32).at[:, :n].set(x.T)

    out_t = pl.pallas_call(
        mlp_kernel,
        out_shape=jax.ShapeDtypeStruct((2, n_pad), jnp.float32),
        grid=(n_pad // LANE_TILE,),
        in_specs=[
            # All 23 param scalars in one SMEM slab (single tiny DMA).
            pl.BlockSpec(memory_space=pltpu.MemorySpace.SMEM),
            pl.BlockSpec((2, LANE_TILE), lambda i: (0, i)),
        ],
        out_specs=pl.BlockSpec((2, LANE_TILE), lambda i: (0, i)),
        compiler_params=pltpu.CompilerParams(
            dimension_semantics=("parallel",)),
    )(packed_params, xt)

    return out_t[:, :n].T


def init_params(key):
    """PyTorch-style nn.Linear init: weights [out, in], U(-1/sqrt(fan_in), +)."""
    ks = jax.random.split(key, 6)

    def lin(kw, kb, fan_in, fan_out):
        bound = 1.0 / jnp.sqrt(fan_in)
        w = jax.random.uniform(kw, (fan_out, fan_in), jnp.float32, -bound, bound)
        b = jax.random.uniform(kb, (fan_out,), jnp.float32, -bound, bound)
        return w, b

    l2 = lin(ks[0], ks[1], 2, 2)
    l3 = lin(ks[2], ks[3], 2, 3)
    l4 = lin(ks[4], ks[5], 3, 2)
    return (l2, l3, l4)


def pack_params(layers):
    (w2, b2), (w3, b3), (w4, b4) = layers
    return jnp.concatenate(
        [w2.reshape(-1), b2, w3.reshape(-1), b3, w4.reshape(-1), b4]
    ).astype(jnp.float32)


def reference_forward(x, layers):
    (w2, b2), (w3, b3), (w4, b4) = layers
    h = jax.nn.sigmoid(x @ w2.T + b2)
    h = jax.nn.sigmoid(h @ w3.T + b3)
    h = jax.nn.sigmoid(h @ w4.T + b4)
    return h


if __name__ == "__main__":
    key = jax.random.PRNGKey(0)
    k_x, k_x2, k_p = jax.random.split(key, 3)

    layers = init_params(k_p)
    packed = pack_params(layers)

    # Small batch (single lane tile).
    x = jax.random.normal(k_x, (8, 2), dtype=jnp.float32)
    out = jax.block_until_ready(mlp_forward(x, packed))
    ref = reference_forward(x, layers)
    assert out.shape == (8, 2)
    # approx=True reciprocal -> slightly relaxed tolerance vs exact sigmoid.
    assert jnp.max(jnp.abs(out - ref)) < 5e-3

    # Larger, non-multiple-of-128 batch exercises padding + multi-tile parallel grid.
    x2 = jax.random.normal(k_x2, (260, 2), dtype=jnp.float32)
    out2 = jax.block_until_ready(mlp_forward(x2, packed))
    ref2 = reference_forward(x2, layers)
    assert out2.shape == (260, 2)
    assert jnp.max(jnp.abs(out2 - ref2)) < 5e-3

    print("KERNEL_OK")
</pallas_src>

<mosaic_0001>
module attributes {stable_mosaic.version = 11 : i64} {
  func.func @mlp_kernel(%arg0: i32, %arg1: memref<23xf32, #tpu.memory_space<smem>>, %arg2: memref<2x128xf32, #tpu.memory_space<vmem>>, %arg3: memref<2x128xf32, #tpu.memory_space<vmem>>) attributes {dimension_semantics = [#tpu.dimension_semantics<parallel>], iteration_bounds = array<i64: 1>, scalar_prefetch = 0 : i64, scratch_operands = 0 : i64, tpu.core_type = #tpu.core_type<tc>, window_params = [{transform_indices = @transform_0, window_bounds = array<i64: 23>}, {transform_indices = @transform_1, window_bounds = array<i64: 2, 128>}, {transform_indices = @transform_2, window_bounds = array<i64: 2, 128>}]} {
    %c0 = arith.constant 0 : index
    %c0_0 = arith.constant 0 : index
    %0 = vector.load %arg2[%c0, %c0_0] : memref<2x128xf32, #tpu.memory_space<vmem>>, vector<1x128xf32>
    %c1 = arith.constant 1 : index
    %c0_1 = arith.constant 0 : index
    %1 = vector.load %arg2[%c1, %c0_1] : memref<2x128xf32, #tpu.memory_space<vmem>>, vector<1x128xf32>
    %c0_2 = arith.constant 0 : index
    %2 = memref.load %arg1[%c0_2] : memref<23xf32, #tpu.memory_space<smem>>
    %3 = vector.broadcast %2 : f32 to vector<1x128xf32>
    %4 = arith.mulf %3, %0 : vector<1x128xf32>
    %c1_3 = arith.constant 1 : index
    %5 = memref.load %arg1[%c1_3] : memref<23xf32, #tpu.memory_space<smem>>
    %6 = vector.broadcast %5 : f32 to vector<1x128xf32>
    %7 = arith.mulf %6, %1 : vector<1x128xf32>
    %8 = arith.addf %4, %7 : vector<1x128xf32>
    %c4 = arith.constant 4 : index
    %9 = memref.load %arg1[%c4] : memref<23xf32, #tpu.memory_space<smem>>
    %10 = vector.broadcast %9 : f32 to vector<1x128xf32>
    %11 = arith.addf %8, %10 : vector<1x128xf32>
    %cst = arith.constant 0.000000e+00 : f32
    %12 = vector.broadcast %cst : f32 to vector<1x128xf32>
    %13 = arith.subf %12, %11 : vector<1x128xf32>
    %14 = math.exp %13 : vector<1x128xf32>
    %cst_4 = arith.constant 1.000000e+00 : f32
    %15 = vector.broadcast %cst_4 : f32 to vector<1x128xf32>
    %16 = arith.addf %15, %14 : vector<1x128xf32>
    %17 = tpu.reciprocal %16 {approx = true} : vector<1x128xf32> -> vector<1x128xf32>
    %c2 = arith.constant 2 : index
    %18 = memref.load %arg1[%c2] : memref<23xf32, #tpu.memory_space<smem>>
    %19 = vector.broadcast %18 : f32 to vector<1x128xf32>
    %20 = arith.mulf %19, %0 : vector<1x128xf32>
    %c3 = arith.constant 3 : index
    %21 = memref.load %arg1[%c3] : memref<23xf32, #tpu.memory_space<smem>>
    %22 = vector.broadcast %21 : f32 to vector<1x128xf32>
    %23 = arith.mulf %22, %1 : vector<1x128xf32>
    %24 = arith.addf %20, %23 : vector<1x128xf32>
    %c5 = arith.constant 5 : index
    %25 = memref.load %arg1[%c5] : memref<23xf32, #tpu.memory_space<smem>>
    %26 = vector.broadcast %25 : f32 to vector<1x128xf32>
    %27 = arith.addf %24, %26 : vector<1x128xf32>
    %cst_5 = arith.constant 0.000000e+00 : f32
    %28 = vector.broadcast %cst_5 : f32 to vector<1x128xf32>
    %29 = arith.subf %28, %27 : vector<1x128xf32>
    %30 = math.exp %29 : vector<1x128xf32>
    %cst_6 = arith.constant 1.000000e+00 : f32
    %31 = vector.broadcast %cst_6 : f32 to vector<1x128xf32>
    %32 = arith.addf %31, %30 : vector<1x128xf32>
    %33 = tpu.reciprocal %32 {approx = true} : vector<1x128xf32> -> vector<1x128xf32>
    %c6 = arith.constant 6 : index
    %34 = memref.load %arg1[%c6] : memref<23xf32, #tpu.memory_space<smem>>
    %35 = vector.broadcast %34 : f32 to vector<1x128xf32>
    %36 = arith.mulf %35, %17 : vector<1x128xf32>
    %c7 = arith.constant 7 : index
    %37 = memref.load %arg1[%c7] : memref<23xf32, #tpu.memory_space<smem>>
    %38 = vector.broadcast %37 : f32 to vector<1x128xf32>
    %39 = arith.mulf %38, %33 : vector<1x128xf32>
    %40 = arith.addf %36, %39 : vector<1x128xf32>
    %c12 = arith.constant 12 : index
    %41 = memref.load %arg1[%c12] : memref<23xf32, #tpu.memory_space<smem>>
    %42 = vector.broadcast %41 : f32 to vector<1x128xf32>
    %43 = arith.addf %40, %42 : vector<1x128xf32>
    %cst_7 = arith.constant 0.000000e+00 : f32
    %44 = vector.broadcast %cst_7 : f32 to vector<1x128xf32>
    %45 = arith.subf %44, %43 : vector<1x128xf32>
    %46 = math.exp %45 : vector<1x128xf32>
    %cst_8 = arith.constant 1.000000e+00 : f32
    %47 = vector.broadcast %cst_8 : f32 to vector<1x128xf32>
    %48 = arith.addf %47, %46 : vector<1x128xf32>
    %49 = tpu.reciprocal %48 {approx = true} : vector<1x128xf32> -> vector<1x128xf32>
    %c8 = arith.constant 8 : index
    %50 = memref.load %arg1[%c8] : memref<23xf32, #tpu.memory_space<smem>>
    %51 = vector.broadcast %50 : f32 to vector<1x128xf32>
    %52 = arith.mulf %51, %17 : vector<1x128xf32>
    %c9 = arith.constant 9 : index
    %53 = memref.load %arg1[%c9] : memref<23xf32, #tpu.memory_space<smem>>
    %54 = vector.broadcast %53 : f32 to vector<1x128xf32>
    %55 = arith.mulf %54, %33 : vector<1x128xf32>
    %56 = arith.addf %52, %55 : vector<1x128xf32>
    %c13 = arith.constant 13 : index
    %57 = memref.load %arg1[%c13] : memref<23xf32, #tpu.memory_space<smem>>
    %58 = vector.broadcast %57 : f32 to vector<1x128xf32>
    %59 = arith.addf %56, %58 : vector<1x128xf32>
    %cst_9 = arith.constant 0.000000e+00 : f32
    %60 = vector.broadcast %cst_9 : f32 to vector<1x128xf32>
    %61 = arith.subf %60, %59 : vector<1x128xf32>
    %62 = math.exp %61 : vector<1x128xf32>
    %cst_10 = arith.constant 1.000000e+00 : f32
    %63 = vector.broadcast %cst_10 : f32 to vector<1x128xf32>
    %64 = arith.addf %63, %62 : vector<1x128xf32>
    %65 = tpu.reciprocal %64 {approx = true} : vector<1x128xf32> -> vector<1x128xf32>
    %c10 = arith.constant 10 : index
    %66 = memref.load %arg1[%c10] : memref<23xf32, #tpu.memory_space<smem>>
    %67 = vector.broadcast %66 : f32 to vector<1x128xf32>
    %68 = arith.mulf %67, %17 : vector<1x128xf32>
    %c11 = arith.constant 11 : index
    %69 = memref.load %arg1[%c11] : memref<23xf32, #tpu.memory_space<smem>>
    %70 = vector.broadcast %69 : f32 to vector<1x128xf32>
    %71 = arith.mulf %70, %33 : vector<1x128xf32>
    %72 = arith.addf %68, %71 : vector<1x128xf32>
    %c14 = arith.constant 14 : index
    %73 = memref.load %arg1[%c14] : memref<23xf32, #tpu.memory_space<smem>>
    %74 = vector.broadcast %73 : f32 to vector<1x128xf32>
    %75 = arith.addf %72, %74 : vector<1x128xf32>
    %cst_11 = arith.constant 0.000000e+00 : f32
    %76 = vector.broadcast %cst_11 : f32 to vector<1x128xf32>
    %77 = arith.subf %76, %75 : vector<1x128xf32>
    %78 = math.exp %77 : vector<1x128xf32>
    %cst_12 = arith.constant 1.000000e+00 : f32
    %79 = vector.broadcast %cst_12 : f32 to vector<1x128xf32>
    %80 = arith.addf %79, %78 : vector<1x128xf32>
    %81 = tpu.reciprocal %80 {approx = true} : vector<1x128xf32> -> vector<1x128xf32>
    %c15 = arith.constant 15 : index
    %82 = memref.load %arg1[%c15] : memref<23xf32, #tpu.memory_space<smem>>
    %83 = vector.broadcast %82 : f32 to vector<1x128xf32>
    %84 = arith.mulf %83, %49 : vector<1x128xf32>
    %c16 = arith.constant 16 : index
    %85 = memref.load %arg1[%c16] : memref<23xf32, #tpu.memory_space<smem>>
    %86 = vector.broadcast %85 : f32 to vector<1x128xf32>
    %87 = arith.mulf %86, %65 : vector<1x128xf32>
    %88 = arith.addf %84, %87 : vector<1x128xf32>
    %c17 = arith.constant 17 : index
    %89 = memref.load %arg1[%c17] : memref<23xf32, #tpu.memory_space<smem>>
    %90 = vector.broadcast %89 : f32 to vector<1x128xf32>
    %91 = arith.mulf %90, %81 : vector<1x128xf32>
    %92 = arith.addf %88, %91 : vector<1x128xf32>
    %c21 = arith.constant 21 : index
    %93 = memref.load %arg1[%c21] : memref<23xf32, #tpu.memory_space<smem>>
    %94 = vector.broadcast %93 : f32 to vector<1x128xf32>
    %95 = arith.addf %92, %94 : vector<1x128xf32>
    %cst_13 = arith.constant 0.000000e+00 : f32
    %96 = vector.broadcast %cst_13 : f32 to vector<1x128xf32>
    %97 = arith.subf %96, %95 : vector<1x128xf32>
    %98 = math.exp %97 : vector<1x128xf32>
    %cst_14 = arith.constant 1.000000e+00 : f32
    %99 = vector.broadcast %cst_14 : f32 to vector<1x128xf32>
    %100 = arith.addf %99, %98 : vector<1x128xf32>
    %101 = tpu.reciprocal %100 {approx = true} : vector<1x128xf32> -> vector<1x128xf32>
    %c18 = arith.constant 18 : index
    %102 = memref.load %arg1[%c18] : memref<23xf32, #tpu.memory_space<smem>>
    %103 = vector.broadcast %102 : f32 to vector<1x128xf32>
    %104 = arith.mulf %103, %49 : vector<1x128xf32>
    %c19 = arith.constant 19 : index
    %105 = memref.load %arg1[%c19] : memref<23xf32, #tpu.memory_space<smem>>
    %106 = vector.broadcast %105 : f32 to vector<1x128xf32>
    %107 = arith.mulf %106, %65 : vector<1x128xf32>
    %108 = arith.addf %104, %107 : vector<1x128xf32>
    %c20 = arith.constant 20 : index
    %109 = memref.load %arg1[%c20] : memref<23xf32, #tpu.memory_space<smem>>
    %110 = vector.broadcast %109 : f32 to vector<1x128xf32>
    %111 = arith.mulf %110, %81 : vector<1x128xf32>
    %112 = arith.addf %108, %111 : vector<1x128xf32>
    %c22 = arith.constant 22 : index
    %113 = memref.load %arg1[%c22] : memref<23xf32, #tpu.memory_space<smem>>
    %114 = vector.broadcast %113 : f32 to vector<1x128xf32>
    %115 = arith.addf %112, %114 : vector<1x128xf32>
    %cst_15 = arith.constant 0.000000e+00 : f32
    %116 = vector.broadcast %cst_15 : f32 to vector<1x128xf32>
    %117 = arith.subf %116, %115 : vector<1x128xf32>
    %118 = math.exp %117 : vector<1x128xf32>
    %cst_16 = arith.constant 1.000000e+00 : f32
    %119 = vector.broadcast %cst_16 : f32 to vector<1x128xf32>
    %120 = arith.addf %119, %118 : vector<1x128xf32>
    %121 = tpu.reciprocal %120 {approx = true} : vector<1x128xf32> -> vector<1x128xf32>
    %c0_17 = arith.constant 0 : index
    %c0_18 = arith.constant 0 : index
    %122 = vector.load %arg3[%c0_17, %c0_18] : memref<2x128xf32, #tpu.memory_space<vmem>>, vector<1x128xf32>
    tpu.vector_store %arg3[%c0_17, %c0_18], %101 {strides = array<i32>} : memref<2x128xf32, #tpu.memory_space<vmem>>, vector<1x128xf32>,
    %c1_19 = arith.constant 1 : index
    %c0_20 = arith.constant 0 : index
    %123 = vector.load %arg3[%c1_19, %c0_20] : memref<2x128xf32, #tpu.memory_space<vmem>>, vector<1x128xf32>
    tpu.vector_store %arg3[%c1_19, %c0_20], %121 {strides = array<i32>} : memref<2x128xf32, #tpu.memory_space<vmem>>, vector<1x128xf32>,
    return
  }
  func.func @transform_0(%arg0: i32) -> i32 {
    %c0_i32 = arith.constant 0 : i32
    %c0_i32_0 = arith.constant 0 : i32
    return %c0_i32 : i32
  }
  func.func @transform_1(%arg0: i32) -> (i32, i32) {
    %c0_i32 = arith.constant 0 : i32
    %c0_i32_0 = arith.constant 0 : i32
    return %c0_i32, %arg0 : i32, i32
  }
  func.func @transform_2(%arg0: i32) -> (i32, i32) {
    %c0_i32 = arith.constant 0 : i32
    %c0_i32_0 = arith.constant 0 : i32
    return %c0_i32, %arg0 : i32, i32
  }
}

</mosaic_0001>

<llo_original>
// kernel: tpu_custom_call.1
$region0: #{tpu_custom_call.1}
  #allocation0 [shape = 'u32[]', space=smem, size = 0x4, offset = 0x4, fixed_abs, tag = 'smem constant byte address 0x4 - core index']
  #allocation1 [shape = 'u32[72,128]{1,0:T(1,128)}', space=vmem, size = 0x9000, scoped, tag = 'internal scratch']
  %s0 = inlined_call_operand.hbm [shape: f32[23], index: 0, kind: input, shape index: {}]
  %s1 = inlined_call_operand.hbm [shape: f32[2,128], index: 1, kind: input, shape index: {}]
  %s2 = inlined_call_operand.hbm [shape: f32[2,128], index: 2, kind: output, shape index: {}]
  %s3 = sld [smem:[#allocation0]]
  $region26: #{tpu_custom_call.1} parent=0
    _
  %s5 = ssub.s32 1, %s3
  %s6 = scalar_select 0, %s5, %s3
  $region1: #{tpu_custom_call.1} parent=0
    #allocation2 [shape = 'u8[512]{0}', space=smem, size = 0x200, scoped, tag = 'input window, operand 0, single buffered']
    #allocation3 [shape = 's32[1]{0}', space=sflag, size = 0x4, scoped, tag = 'scoped memory for tpu_custom_call.1']
    #allocation4 [shape = 's32[1]{0}', space=sflag, size = 0x4, scoped, tag = 'scoped memory for tpu_custom_call.1']
    #allocation5 [shape = 's32[1]{0}', space=sflag, size = 0x4, scoped, tag = 'scoped memory for tpu_custom_call.1']
    #allocation6 [shape = 'u8[1024]{0}', space=vmem, size = 0x400, scoped, tag = 'input window, operand 1, single buffered']
    #allocation7 [shape = 'u8[1024]{0}', space=vmem, size = 0x400, scoped, tag = 'output window, operand 0, single buffered']
    %7 = vsyncpa [#allocation5], 0
    %8 = vsyncpa [#allocation3], 0
    %9 = vsyncpa [#allocation4], 0
    // Predicated region
    $region2: #{tpu_custom_call.1} parent=1 // pred_check
      _
    $region3: #{tpu_custom_call.1} parent=1 // pred_check_branch
      %11 = sbr.rel (0) target = $region5
    $region4: #{tpu_custom_call.1} parent=1 // pred_region
      %13 = vsyncadd [#allocation5], 0
      %s15 = sshll.u32 %s0, 4
      %s16 = int_to_ptr.hbm [resolvable:$true] %s15
      %18 = dma.hbm_to_smem %s16, 16, [#allocation2], [#allocation5]
    $region5: #{tpu_custom_call.1} parent=1 // pred_fallthru
      _
    // Predicated region
    $region6: #{tpu_custom_call.1} parent=1 // pred_check
      _
    $region7: #{tpu_custom_call.1} parent=1 // pred_check_branch
      %20 = sbr.rel (0) target = $region9
    $region8: #{tpu_custom_call.1} parent=1 // pred_region
      %22 = vsyncadd [#allocation3], 0
      %s24 = sshll.u32 %s1, 4
      %s25 = int_to_ptr.hbm [resolvable:$true] %s24
      %s26 = sshll.u32 [#allocation6], 4
      %s27 = int_to_ptr.vmem [resolvable:$true] %s26
      %29 = dma.hbm_to_vmem [thread:$0]  %s25, 32, %s27, [#allocation3]
    $region9: #{tpu_custom_call.1} parent=1 // pred_fallthru
      _
    // Predicated region
    $region10: #{tpu_custom_call.1} parent=1 // pred_check
      _
    $region11: #{tpu_custom_call.1} parent=1 // pred_check_branch
      %31 = sbr.rel (0) target = $region13
    $region12: #{tpu_custom_call.1} parent=1 // pred_region
      %33 = dma.done [#allocation5], 16
    $region13: #{tpu_custom_call.1} parent=1 // pred_fallthru
      _
    // Predicated region
    $region14: #{tpu_custom_call.1} parent=1 // pred_check
      _
    $region15: #{tpu_custom_call.1} parent=1 // pred_check_branch
      %35 = sbr.rel (0) target = $region17
    $region16: #{tpu_custom_call.1} parent=1 // pred_region
      %37 = dma.done [#allocation3], 32
    $region17: #{tpu_custom_call.1} parent=1 // pred_fallthru
      _
    %38 = sfence
    %v39 = vld [vmem:[#allocation6] sm:$0x1]
    %v40 = vld [vmem:[#allocation6 + $0x1] sm:$0x1]
    %s41 = sld [smem:[#allocation2]]
    %v42 = vstv %s41
    %v43 = vmul.f32 %v42, %v39
    %s44 = sld [smem:[#allocation2 + $0x1]]
    %v45 = vstv %s44
    %v46 = vmul.f32 %v45, %v40
    %v47 = vadd.f32 %v43, %v46
    %s48 = sld [smem:[#allocation2 + $0x4]]
    %v49 = vstv %s48
    %v50 = vadd.f32 %v47, %v49
    %v51 = vsub.f32 0.0, %v50
    %v52 = vmul.f32 %v51, 1.442695
    %v53 = vpow.pop %v52
    %v54 = vadd.f32 %v53, 1.0
    %v55 = vrcp.pop %v54
    %s56 = sld [smem:[#allocation2 + $0x2]]
    %v57 = vstv %s56
    %v58 = vmul.f32 %v57, %v39
    %s59 = sld [smem:[#allocation2 + $0x3]]
    %v60 = vstv %s59
    %v61 = vmul.f32 %v60, %v40
    %v62 = vadd.f32 %v58, %v61
    %s63 = sld [smem:[#allocation2 + $0x5]]
    %v64 = vstv %s63
    %v65 = vadd.f32 %v62, %v64
    %v66 = vsub.f32 0.0, %v65
    %v67 = vmul.f32 %v66, 1.442695
    %v68 = vpow.pop %v67
    %v69 = vadd.f32 %v68, 1.0
    %v70 = vrcp.pop %v69
    %s71 = sld [smem:[#allocation2 + $0x6]]
    %v72 = vstv %s71
    %v73 = vmul.f32 %v72, %v55
    %s74 = sld [smem:[#allocation2 + $0x7]]
    %v75 = vstv %s74
    %v76 = vmul.f32 %v75, %v70
    %v77 = vadd.f32 %v73, %v76
    %s78 = sld [smem:[#allocation2 + $0xc]]
    %v79 = vstv %s78
    %v80 = vadd.f32 %v77, %v79
    %v81 = vsub.f32 0.0, %v80
    %v82 = vmul.f32 %v81, 1.442695
    %v83 = vpow.pop %v82
    %v84 = vadd.f32 %v83, 1.0
    %v85 = vrcp.pop %v84
    %s86 = sld [smem:[#allocation2 + $0x8]]
    %v87 = vstv %s86
    %v88 = vmul.f32 %v87, %v55
    %s89 = sld [smem:[#allocation2 + $0x9]]
    %v90 = vstv %s89
    %v91 = vmul.f32 %v90, %v70
    %v92 = vadd.f32 %v88, %v91
    %s93 = sld [smem:[#allocation2 + $0xd]]
    %v94 = vstv %s93
    %v95 = vadd.f32 %v92, %v94
    %v96 = vsub.f32 0.0, %v95
    %v97 = vmul.f32 %v96, 1.442695
    %v98 = vpow.pop %v97
    %v99 = vadd.f32 %v98, 1.0
    %v100 = vrcp.pop %v99
    %s101 = sld [smem:[#allocation2 + $0xa]]
    %v102 = vstv %s101
    %v103 = vmul.f32 %v102, %v55
    %s104 = sld [smem:[#allocation2 + $0xb]]
    %v105 = vstv %s104
    %v106 = vmul.f32 %v105, %v70
    %v107 = vadd.f32 %v103, %v106
    %s108 = sld [smem:[#allocation2 + $0xe]]
    %v109 = vstv %s108
    %v110 = vadd.f32 %v107, %v109
    %v111 = vsub.f32 0.0, %v110
    %v112 = vmul.f32 %v111, 1.442695
    %v113 = vpow.pop %v112
    %v114 = vadd.f32 %v113, 1.0
    %v115 = vrcp.pop %v114
    %s116 = sld [smem:[#allocation2 + $0xf]]
    %v117 = vstv %s116
    %v118 = vmul.f32 %v117, %v85
    %s119 = sld [smem:[#allocation2 + $0x10]]
    %v120 = vstv %s119
    %v121 = vmul.f32 %v120, %v100
    %v122 = vadd.f32 %v118, %v121
    %s123 = sld [smem:[#allocation2 + $0x11]]
    %v124 = vstv %s123
    %v125 = vmul.f32 %v124, %v115
    %v126 = vadd.f32 %v122, %v125
    %s127 = sld [smem:[#allocation2 + $0x15]]
    %v128 = vstv %s127
    %v129 = vadd.f32 %v126, %v128
    %v130 = vsub.f32 0.0, %v129
    %v131 = vmul.f32 %v130, 1.442695
    %v132 = vpow.pop %v131
    %v133 = vadd.f32 %v132, 1.0
    %v134 = vrcp.pop %v133
    %s135 = sld [smem:[#allocation2 + $0x12]]
    %v136 = vstv %s135
    %v137 = vmul.f32 %v136, %v85
    %s138 = sld [smem:[#allocation2 + $0x13]]
    %v139 = vstv %s138
    %v140 = vmul.f32 %v139, %v100
    %v141 = vadd.f32 %v137, %v140
    %s142 = sld [smem:[#allocation2 + $0x14]]
    %v143 = vstv %s142
    %v144 = vmul.f32 %v143, %v115
    %v145 = vadd.f32 %v141, %v144
    %s146 = sld [smem:[#allocation2 + $0x16]]
    %v147 = vstv %s146
    %v148 = vadd.f32 %v145, %v147
    %v149 = vsub.f32 0.0, %v148
    %v150 = vmul.f32 %v149, 1.442695
    %v151 = vpow.pop %v150
    %v152 = vadd.f32 %v151, 1.0
    %v153 = vrcp.pop %v152
    %154 = vst [vmem:[#allocation7] sm:$0x1] %v134
    %155 = vst [vmem:[#allocation7 + $0x1] sm:$0x1] %v153
    // Predicated region
    $region18: #{tpu_custom_call.1} parent=1 // pred_check
      _
    $region19: #{tpu_custom_call.1} parent=1 // pred_check_branch
      %157 = sbr.rel (0) target = $region21
    $region20: #{tpu_custom_call.1} parent=1 // pred_region
      %159 = vsyncadd [#allocation4], 0
      %s161 = sshll.u32 [#allocation7], 4
      %s162 = int_to_ptr.vmem [resolvable:$true] %s161
      %s163 = sshll.u32 %s2, 4
      %s164 = int_to_ptr.hbm [resolvable:$true] %s163
      %166 = dma.vmem_to_hbm [thread:$0]  %s162, 32, %s164, [#allocation4]
    $region21: #{tpu_custom_call.1} parent=1 // pred_fallthru
      _
    // Predicated region
    $region22: #{tpu_custom_call.1} parent=1 // pred_check
      _
    $region23: #{tpu_custom_call.1} parent=1 // pred_check_branch
      %168 = sbr.rel (0) target = $region25
    $region24: #{tpu_custom_call.1} parent=1 // pred_region
      %170 = dma.done [#allocation4], 32
    $region25: #{tpu_custom_call.1} parent=1 // pred_fallthru
      _
    %171 = vsyncpa [#allocation3], 1
    %172 = vsyncpa [#allocation4], 1
    %173 = vsyncpa [#allocation5], 1

</llo_original>
